<compile_context>
chip_gen: v7x
topology: tpu7x:2x2x1
jax: 0.10.0
libtpu: 0.0.40
codegen_flags: <defaults>
</compile_context>

<pallas_src>
import jax
import jax.numpy as jnp
from jax.experimental import pallas as pl
from jax.experimental.pallas import tpu as pltpu

INPUT_SIZE = 5
OUTPUT_SIZE = 2
_LANES = 128


def _linear_kernel(x_ref, w_ref, b_ref, o_ref):
    # x_ref: VMEM (IN, TB)   -- batch on the lane axis (lane-dense)
    # w_ref: SMEM (OUT*IN,)  -- flattened PyTorch weight, row-major
    # b_ref: SMEM (OUT,)
    # o_ref: VMEM (OUT, TB)  -- lane-dense output
    in_f, tb = x_ref.shape
    out_f = o_ref.shape[0]
    x = x_ref[...]  # (IN, TB) f32
    # Fully unrolled OUT x IN = 10 VPU FMAs; bias folded into accumulator init.
    for j in range(out_f):
        acc = jnp.full((1, tb), b_ref[j], dtype=jnp.float32)
        for k in range(in_f):
            acc = acc + w_ref[j * in_f + k] * x[k:k + 1, :]
        o_ref[j:j + 1, :] = acc.astype(o_ref.dtype)


def linear_pallas(x, weight, bias, *, max_tile_b=512):
    """Equivalent of torch.nn.Linear forward: x @ weight.T + bias.

    x:      (B, in_features)  float32
    weight: (out_features, in_features)  float32   (PyTorch convention)
    bias:   (out_features,)  float32
    """
    B, in_f = x.shape
    out_f, in_f_w = weight.shape
    assert in_f == in_f_w

    # Batch tile: multiple of 128 lanes, capped so VMEM blocks stay tiny.
    tb = min(max_tile_b, pl.cdiv(B, _LANES) * _LANES)
    b_pad = pl.cdiv(B, tb) * tb

    # Transposed, lane-dense input (IN, B_pad); zero-pad the batch tail.
    xt = x.T
    if b_pad != B:
        xt = jnp.pad(xt, ((0, 0), (0, b_pad - B)))

    w_flat = weight.reshape(-1)  # (out_f * in_f,) -> 1-D SMEM (no 2-D padding)

    out_t = pl.pallas_call(
        _linear_kernel,
        out_shape=jax.ShapeDtypeStruct((out_f, b_pad), x.dtype),
        grid_spec=pltpu.PrefetchScalarGridSpec(
            num_scalar_prefetch=0,
            grid=(b_pad // tb,),
            in_specs=[
                pl.BlockSpec((in_f, tb), lambda i: (0, i)),
                pl.BlockSpec(memory_space=pltpu.MemorySpace.SMEM),
                pl.BlockSpec(memory_space=pltpu.MemorySpace.SMEM),
            ],
            out_specs=pl.BlockSpec((out_f, tb), lambda i: (0, i)),
        ),
        compiler_params=pltpu.CompilerParams(
            dimension_semantics=("parallel",),
        ),
        cost_estimate=pl.CostEstimate(
            flops=2 * B * in_f * out_f,
            transcendentals=0,
            bytes_accessed=4 * (B * in_f + out_f * in_f + out_f + B * out_f),
        ),
    )(xt, w_flat, bias)

    # Back to the PyTorch-facing (B, out_features) layout.
    return out_t[:, :B].T


class Model:
    """JAX/Pallas mirror of the PyTorch Model (a single nn.Linear)."""

    def __init__(self, input_size, output_size, key):
        k_w, k_b = jax.random.split(key)
        # Deterministic init mimicking nn.Linear's uniform(-1/sqrt(fan_in), +1/sqrt(fan_in)).
        bound = 1.0 / jnp.sqrt(jnp.float32(input_size))
        self.weight = jax.random.uniform(
            k_w, (output_size, input_size), jnp.float32, -bound, bound
        )
        self.bias = jax.random.uniform(
            k_b, (output_size,), jnp.float32, -bound, bound
        )

    def forward(self, x):
        out = linear_pallas(x, self.weight, self.bias)
        print("  In Model: input size", x.shape, "output size", out.shape)
        return out


if __name__ == "__main__":
    key = jax.random.PRNGKey(0)
    k_x, k_params = jax.random.split(key)

    batch = 8
    x = jax.random.normal(k_x, (batch, INPUT_SIZE), jnp.float32)

    model = Model(INPUT_SIZE, OUTPUT_SIZE, k_params)
    out = model.forward(x)
    out = jax.block_until_ready(out)

    # Correctness check against plain-JAX reference of nn.Linear forward.
    ref = x @ model.weight.T + model.bias
    assert out.shape == (batch, OUTPUT_SIZE)
    assert jnp.allclose(out, ref, atol=1e-5, rtol=1e-5)

    print("KERNEL_OK")
</pallas_src>

<mosaic_0001>
module attributes {stable_mosaic.version = 11 : i64} {
  func.func @_linear_kernel(%arg0: i32, %arg1: memref<5x128xf32, #tpu.memory_space<vmem>>, %arg2: memref<10xf32, #tpu.memory_space<smem>>, %arg3: memref<2xf32, #tpu.memory_space<smem>>, %arg4: memref<2x128xf32, #tpu.memory_space<vmem>>) attributes {dimension_semantics = [#tpu.dimension_semantics<parallel>], iteration_bounds = array<i64: 1>, scalar_prefetch = 0 : i64, scratch_operands = 0 : i64, tpu.core_type = #tpu.core_type<tc>, window_params = [{transform_indices = @transform_0, window_bounds = array<i64: 5, 128>}, {transform_indices = @transform_1, window_bounds = array<i64: 10>}, {transform_indices = @transform_2, window_bounds = array<i64: 2>}, {transform_indices = @transform_3, window_bounds = array<i64: 2, 128>}]} {
    %c0 = arith.constant 0 : index
    %c0_0 = arith.constant 0 : index
    %0 = vector.load %arg1[%c0, %c0_0] : memref<5x128xf32, #tpu.memory_space<vmem>>, vector<5x128xf32>
    %c0_1 = arith.constant 0 : index
    %1 = memref.load %arg3[%c0_1] : memref<2xf32, #tpu.memory_space<smem>>
    %2 = vector.broadcast %1 : f32 to vector<1x128xf32>
    %c0_2 = arith.constant 0 : index
    %3 = memref.load %arg2[%c0_2] : memref<10xf32, #tpu.memory_space<smem>>
    %4 = vector.extract_strided_slice %0 {offsets = [0, 0], sizes = [1, 128], strides = [1, 1]} : vector<5x128xf32> to vector<1x128xf32>
    %5 = vector.broadcast %3 : f32 to vector<1x128xf32>
    %6 = arith.mulf %5, %4 : vector<1x128xf32>
    %7 = arith.addf %2, %6 : vector<1x128xf32>
    %c1 = arith.constant 1 : index
    %8 = memref.load %arg2[%c1] : memref<10xf32, #tpu.memory_space<smem>>
    %9 = vector.extract_strided_slice %0 {offsets = [1, 0], sizes = [1, 128], strides = [1, 1]} : vector<5x128xf32> to vector<1x128xf32>
    %10 = vector.broadcast %8 : f32 to vector<1x128xf32>
    %11 = arith.mulf %10, %9 : vector<1x128xf32>
    %12 = arith.addf %7, %11 : vector<1x128xf32>
    %c2 = arith.constant 2 : index
    %13 = memref.load %arg2[%c2] : memref<10xf32, #tpu.memory_space<smem>>
    %14 = vector.extract_strided_slice %0 {offsets = [2, 0], sizes = [1, 128], strides = [1, 1]} : vector<5x128xf32> to vector<1x128xf32>
    %15 = vector.broadcast %13 : f32 to vector<1x128xf32>
    %16 = arith.mulf %15, %14 : vector<1x128xf32>
    %17 = arith.addf %12, %16 : vector<1x128xf32>
    %c3 = arith.constant 3 : index
    %18 = memref.load %arg2[%c3] : memref<10xf32, #tpu.memory_space<smem>>
    %19 = vector.extract_strided_slice %0 {offsets = [3, 0], sizes = [1, 128], strides = [1, 1]} : vector<5x128xf32> to vector<1x128xf32>
    %20 = vector.broadcast %18 : f32 to vector<1x128xf32>
    %21 = arith.mulf %20, %19 : vector<1x128xf32>
    %22 = arith.addf %17, %21 : vector<1x128xf32>
    %c4 = arith.constant 4 : index
    %23 = memref.load %arg2[%c4] : memref<10xf32, #tpu.memory_space<smem>>
    %24 = vector.extract_strided_slice %0 {offsets = [4, 0], sizes = [1, 128], strides = [1, 1]} : vector<5x128xf32> to vector<1x128xf32>
    %25 = vector.broadcast %23 : f32 to vector<1x128xf32>
    %26 = arith.mulf %25, %24 : vector<1x128xf32>
    %27 = arith.addf %22, %26 : vector<1x128xf32>
    %c0_3 = arith.constant 0 : index
    %c0_4 = arith.constant 0 : index
    %28 = vector.load %arg4[%c0_3, %c0_4] : memref<2x128xf32, #tpu.memory_space<vmem>>, vector<1x128xf32>
    tpu.vector_store %arg4[%c0_3, %c0_4], %27 {strides = array<i32>} : memref<2x128xf32, #tpu.memory_space<vmem>>, vector<1x128xf32>,
    %c1_5 = arith.constant 1 : index
    %29 = memref.load %arg3[%c1_5] : memref<2xf32, #tpu.memory_space<smem>>
    %30 = vector.broadcast %29 : f32 to vector<1x128xf32>
    %c5 = arith.constant 5 : index
    %31 = memref.load %arg2[%c5] : memref<10xf32, #tpu.memory_space<smem>>
    %32 = vector.extract_strided_slice %0 {offsets = [0, 0], sizes = [1, 128], strides = [1, 1]} : vector<5x128xf32> to vector<1x128xf32>
    %33 = vector.broadcast %31 : f32 to vector<1x128xf32>
    %34 = arith.mulf %33, %32 : vector<1x128xf32>
    %35 = arith.addf %30, %34 : vector<1x128xf32>
    %c6 = arith.constant 6 : index
    %36 = memref.load %arg2[%c6] : memref<10xf32, #tpu.memory_space<smem>>
    %37 = vector.extract_strided_slice %0 {offsets = [1, 0], sizes = [1, 128], strides = [1, 1]} : vector<5x128xf32> to vector<1x128xf32>
    %38 = vector.broadcast %36 : f32 to vector<1x128xf32>
    %39 = arith.mulf %38, %37 : vector<1x128xf32>
    %40 = arith.addf %35, %39 : vector<1x128xf32>
    %c7 = arith.constant 7 : index
    %41 = memref.load %arg2[%c7] : memref<10xf32, #tpu.memory_space<smem>>
    %42 = vector.extract_strided_slice %0 {offsets = [2, 0], sizes = [1, 128], strides = [1, 1]} : vector<5x128xf32> to vector<1x128xf32>
    %43 = vector.broadcast %41 : f32 to vector<1x128xf32>
    %44 = arith.mulf %43, %42 : vector<1x128xf32>
    %45 = arith.addf %40, %44 : vector<1x128xf32>
    %c8 = arith.constant 8 : index
    %46 = memref.load %arg2[%c8] : memref<10xf32, #tpu.memory_space<smem>>
    %47 = vector.extract_strided_slice %0 {offsets = [3, 0], sizes = [1, 128], strides = [1, 1]} : vector<5x128xf32> to vector<1x128xf32>
    %48 = vector.broadcast %46 : f32 to vector<1x128xf32>
    %49 = arith.mulf %48, %47 : vector<1x128xf32>
    %50 = arith.addf %45, %49 : vector<1x128xf32>
    %c9 = arith.constant 9 : index
    %51 = memref.load %arg2[%c9] : memref<10xf32, #tpu.memory_space<smem>>
    %52 = vector.extract_strided_slice %0 {offsets = [4, 0], sizes = [1, 128], strides = [1, 1]} : vector<5x128xf32> to vector<1x128xf32>
    %53 = vector.broadcast %51 : f32 to vector<1x128xf32>
    %54 = arith.mulf %53, %52 : vector<1x128xf32>
    %55 = arith.addf %50, %54 : vector<1x128xf32>
    %c1_6 = arith.constant 1 : index
    %c0_7 = arith.constant 0 : index
    %56 = vector.load %arg4[%c1_6, %c0_7] : memref<2x128xf32, #tpu.memory_space<vmem>>, vector<1x128xf32>
    tpu.vector_store %arg4[%c1_6, %c0_7], %55 {strides = array<i32>} : memref<2x128xf32, #tpu.memory_space<vmem>>, vector<1x128xf32>,
    return
  }
  func.func @transform_0(%arg0: i32) -> (i32, i32) {
    %c0_i32 = arith.constant 0 : i32
    %c0_i32_0 = arith.constant 0 : i32
    return %c0_i32, %arg0 : i32, i32
  }
  func.func @transform_1(%arg0: i32) -> i32 {
    %c0_i32 = arith.constant 0 : i32
    %c0_i32_0 = arith.constant 0 : i32
    return %c0_i32 : i32
  }
  func.func @transform_2(%arg0: i32) -> i32 {
    %c0_i32 = arith.constant 0 : i32
    %c0_i32_0 = arith.constant 0 : i32
    return %c0_i32 : i32
  }
  func.func @transform_3(%arg0: i32) -> (i32, i32) {
    %c0_i32 = arith.constant 0 : i32
    %c0_i32_0 = arith.constant 0 : i32
    return %c0_i32, %arg0 : i32, i32
  }
}

</mosaic_0001>

<llo_original>
// kernel: tpu_custom_call.1
$region0: #{tpu_custom_call.1}
  #allocation0 [shape = 'u32[]', space=smem, size = 0x4, offset = 0x4, fixed_abs, tag = 'smem constant byte address 0x4 - core index']
  #allocation1 [shape = 'u32[144,128]{1,0:T(1,128)}', space=vmem, size = 0x12000, scoped, tag = 'internal scratch']
  %s0 = inlined_call_operand.hbm [shape: f32[5,128], index: 0, kind: input, shape index: {}]
  %s1 = inlined_call_operand.vmem [shape: f32[10], index: 1, kind: input, shape index: {}]
  %s2 = inlined_call_operand.vmem [shape: f32[2], index: 2, kind: input, shape index: {}]
  %s3 = inlined_call_operand.hbm [shape: f32[2,128], index: 3, kind: output, shape index: {}]
  %s4 = sld [smem:[#allocation0]]
  $region34: #{tpu_custom_call.1} parent=0
    _
  %s6 = ssub.s32 1, %s4
  %s7 = scalar_select 0, %s6, %s4
  $region1: #{tpu_custom_call.1} parent=0
    #allocation2 [shape = 'u8[4096]{0}', space=vmem, size = 0x1000, scoped, tag = 'input window, operand 0, single buffered']
    #allocation3 [shape = 's32[1]{0}', space=sflag, size = 0x4, scoped, tag = 'scoped memory for tpu_custom_call.1']
    #allocation4 [shape = 's32[1]{0}', space=sflag, size = 0x4, scoped, tag = 'scoped memory for tpu_custom_call.1']
    #allocation5 [shape = 's32[1]{0}', space=sflag, size = 0x4, scoped, tag = 'scoped memory for tpu_custom_call.1']
    #allocation6 [shape = 'u8[512]{0}', space=smem, size = 0x200, scoped, tag = 'input window, operand 1, single buffered']
    #allocation7 [shape = 'u8[512]{0}', space=smem, size = 0x200, scoped, tag = 'input window, operand 2, single buffered']
    #allocation8 [shape = 's32[1]{0}', space=sflag, size = 0x4, scoped, tag = 'scoped memory for tpu_custom_call.1']
    #allocation9 [shape = 'u8[1024]{0}', space=vmem, size = 0x400, scoped, tag = 'output window, operand 0, single buffered']
    %8 = vsyncpa [#allocation3], 0
    %9 = vsyncpa [#allocation5], 0
    %10 = vsyncpa [#allocation8], 0
    %11 = vsyncpa [#allocation4], 0
    // Predicated region
    $region2: #{tpu_custom_call.1} parent=1 // pred_check
      _
    $region3: #{tpu_custom_call.1} parent=1 // pred_check_branch
      %13 = sbr.rel (0) target = $region5
    $region4: #{tpu_custom_call.1} parent=1 // pred_region
      %s15 = ssub.s32 128, 128
      %16 = vsyncadd [#allocation3], %s15
      %s18 = sshll.u32 [#allocation2], 4
      %s19 = int_to_ptr.vmem [resolvable:$true] %s18
      %21 = dma.hbm_to_vmem [thread:$0]  %s0, 128, %s19, [#allocation3]
    $region5: #{tpu_custom_call.1} parent=1 // pred_fallthru
      _
    // Predicated region
    $region6: #{tpu_custom_call.1} parent=1 // pred_check
      _
    $region7: #{tpu_custom_call.1} parent=1 // pred_check_branch
      %23 = sbr.rel (0) target = $region9
    $region8: #{tpu_custom_call.1} parent=1 // pred_region
      %s25 = ssub.s32 16, 16
      %26 = vsyncadd [#allocation5], %s25
      %s28 = sshll.u32 %s1, 4
      %s29 = int_to_ptr.vmem [resolvable:$true] %s28
      %31 = dma.vmem_to_smem %s29, 16, [#allocation6], [#allocation5]
    $region9: #{tpu_custom_call.1} parent=1 // pred_fallthru
      _
    // Predicated region
    $region10: #{tpu_custom_call.1} parent=1 // pred_check
      _
    $region11: #{tpu_custom_call.1} parent=1 // pred_check_branch
      %33 = sbr.rel (0) target = $region13
    $region12: #{tpu_custom_call.1} parent=1 // pred_region
      %s35 = ssub.s32 16, 16
      %36 = vsyncadd [#allocation8], %s35
      %s38 = sshll.u32 %s2, 4
      %s39 = int_to_ptr.vmem [resolvable:$true] %s38
      %41 = dma.vmem_to_smem %s39, 16, [#allocation7], [#allocation8]
    $region13: #{tpu_custom_call.1} parent=1 // pred_fallthru
      _
    // Predicated region
    $region14: #{tpu_custom_call.1} parent=1 // pred_check
      _
    $region15: #{tpu_custom_call.1} parent=1 // pred_check_branch
      %43 = sbr.rel (0) target = $region17
    $region16: #{tpu_custom_call.1} parent=1 // pred_region
      %44 = dma.done [#allocation3], 128
    $region17: #{tpu_custom_call.1} parent=1 // pred_fallthru
      _
    // Predicated region
    $region18: #{tpu_custom_call.1} parent=1 // pred_check
      _
    $region19: #{tpu_custom_call.1} parent=1 // pred_check_branch
      %46 = sbr.rel (0) target = $region21
    $region20: #{tpu_custom_call.1} parent=1 // pred_region
      %47 = dma.done [#allocation5], 16
    $region21: #{tpu_custom_call.1} parent=1 // pred_fallthru
      _
    // Predicated region
    $region22: #{tpu_custom_call.1} parent=1 // pred_check
      _
    $region23: #{tpu_custom_call.1} parent=1 // pred_check_branch
      %49 = sbr.rel (0) target = $region25
    $region24: #{tpu_custom_call.1} parent=1 // pred_region
      %50 = dma.done [#allocation8], 16
    $region25: #{tpu_custom_call.1} parent=1 // pred_fallthru
      _
    %51 = sfence
    %v52 = vld [vmem:[#allocation2] sm:$0x1f]
    %s53 = sld [smem:[#allocation7]]
    %v54 = vstv %s53
    %s55 = sld [smem:[#allocation6]]
    %v56 = vstv %s55
    %v57 = vmul.f32 %v56, %v52
    %v58 = vadd.f32 %v54, %v57
    %s59 = sld [smem:[#allocation6 + $0x1]]
    %v60 = vstv %s59
    %v61 = vmul.f32 %v60, %v52
    %v63 = vrot.slane %v61, 1
    %v65 = vadd.f32 %v58, %v63
    %s66 = sld [smem:[#allocation6 + $0x2]]
    %v67 = vstv %s66
    %v68 = vmul.f32 %v67, %v52
    %v70 = vrot.slane %v68, 2
    %v72 = vadd.f32 %v65, %v70
    %s73 = sld [smem:[#allocation6 + $0x3]]
    %v74 = vstv %s73
    %v75 = vmul.f32 %v74, %v52
    %v77 = vrot.slane %v75, 3
    %v79 = vadd.f32 %v72, %v77
    %s80 = sld [smem:[#allocation6 + $0x4]]
    %v81 = vstv %s80
    %v82 = vmul.f32 %v81, %v52
    %v84 = vrot.slane %v82, 4
    %v86 = vadd.f32 %v79, %v84
    %87 = vst [vmem:[#allocation9] sm:$0x1] %v86
    %s88 = sld [smem:[#allocation7 + $0x1]]
    %v89 = vstv %s88
    %s90 = sld [smem:[#allocation6 + $0x5]]
    %v91 = vstv %s90
    %v92 = vmul.f32 %v91, %v52
    %v93 = vadd.f32 %v89, %v92
    %s94 = sld [smem:[#allocation6 + $0x6]]
    %v95 = vstv %s94
    %v96 = vmul.f32 %v95, %v52
    %v98 = vrot.slane %v96, 1
    %v100 = vadd.f32 %v93, %v98
    %s101 = sld [smem:[#allocation6 + $0x7]]
    %v102 = vstv %s101
    %v103 = vmul.f32 %v102, %v52
    %v105 = vrot.slane %v103, 2
    %v107 = vadd.f32 %v100, %v105
    %s108 = sld [smem:[#allocation6 + $0x8]]
    %v109 = vstv %s108
    %v110 = vmul.f32 %v109, %v52
    %v112 = vrot.slane %v110, 3
    %v114 = vadd.f32 %v107, %v112
    %s115 = sld [smem:[#allocation6 + $0x9]]
    %v116 = vstv %s115
    %v117 = vmul.f32 %v116, %v52
    %v119 = vrot.slane %v117, 4
    %v121 = vadd.f32 %v114, %v119
    %122 = vst [vmem:[#allocation9 + $0x1] sm:$0x1] %v121
    // Predicated region
    $region26: #{tpu_custom_call.1} parent=1 // pred_check
      _
    $region27: #{tpu_custom_call.1} parent=1 // pred_check_branch
      %124 = sbr.rel (0) target = $region29
    $region28: #{tpu_custom_call.1} parent=1 // pred_region
      %s126 = ssub.s32 32, 32
      %127 = vsyncadd [#allocation4], %s126
      %s129 = sshll.u32 [#allocation9], 4
      %s130 = int_to_ptr.vmem [resolvable:$true] %s129
      %132 = dma.vmem_to_hbm [thread:$0]  %s130, 32, %s3, [#allocation4]
    $region29: #{tpu_custom_call.1} parent=1 // pred_fallthru
      _
    // Predicated region
    $region30: #{tpu_custom_call.1} parent=1 // pred_check
      _
    $region31: #{tpu_custom_call.1} parent=1 // pred_check_branch
      %134 = sbr.rel (0) target = $region33
    $region32: #{tpu_custom_call.1} parent=1 // pred_region
      %135 = dma.done [#allocation4], 32
    $region33: #{tpu_custom_call.1} parent=1 // pred_fallthru
      _
    %136 = vsyncpa [#allocation3], 1
    %137 = vsyncpa [#allocation4], 1
    %138 = vsyncpa [#allocation5], 1
    %139 = vsyncpa [#allocation8], 1

</llo_original>
